<compile_context>
chip_gen: v6e
topology: v6e:2x2x1
jax: 0.10.0
libtpu: 0.0.40
codegen_flags: <defaults>
</compile_context>

<pallas_src>
import jax
import jax.numpy as jnp
from jax.experimental import pallas as pl
from jax.experimental.pallas import tpu as pltpu


# --------------------------------------------------------------------------
# Kernels
# --------------------------------------------------------------------------

def _fused_reparam_matmul_kernel(x_ref, wm_ref, wlv_ref, ew_ref,
                                 bm_ref, blv_ref, eb_ref, out_ref, acc_ref):
    """Small-batch: fuse weight reparam + matmul + bias reparam/add."""
    k = pl.program_id(1)

    @pl.when(k == 0)
    def _init():
        acc_ref[...] = jnp.zeros_like(acc_ref)

    # w = mean + eps * exp(0.5 * logvar)   (VPU + EUP, on-the-fly per tile)
    w_tile = (wm_ref[...] + ew_ref[...] * jnp.exp(0.5 * wlv_ref[...])
              ).astype(x_ref.dtype)

    # (Mp, tk) x (tn, tk) contracted over K -> (Mp, tn); the (O, I)-layout
    # weight tile is consumed directly by the MXU (no in-kernel transpose).
    acc_ref[...] += jax.lax.dot_general(
        x_ref[...], w_tile,
        dimension_numbers=(((1,), (1,)), ((), ())),
        preferred_element_type=jnp.float32)

    @pl.when(k == pl.num_programs(1) - 1)
    def _finalize():
        # Bias reparameterization is free VPU/EUP work in the finalize step.
        b = bm_ref[...] + eb_ref[...] * jnp.exp(0.5 * blv_ref[...])
        out_ref[...] = (acc_ref[...] + b).astype(out_ref.dtype)


def _reparam_transpose_kernel(mean_ref, logvar_ref, eps_ref, out_ref):
    """Large-batch pass 1: w = mean + eps*exp(0.5*logvar), emitted in (K, N)
    layout (transpose once here, on the idle XLU slot of this HBM-bound pass)."""
    w = mean_ref[...] + eps_ref[...] * jnp.exp(0.5 * logvar_ref[...])
    out_ref[...] = w.T.astype(out_ref.dtype)


def _matmul_bias_kernel(x_ref, w_ref, bm_ref, blv_ref, eb_ref, out_ref, acc_ref):
    """Large-batch pass 2: tiled MXU matmul against the (K, N) weight with the
    bias reparam folded into the K-finalize step."""
    k = pl.program_id(2)

    @pl.when(k == 0)
    def _init():
        acc_ref[...] = jnp.zeros_like(acc_ref)

    acc_ref[...] += jnp.dot(x_ref[...], w_ref[...],
                            preferred_element_type=jnp.float32)

    @pl.when(k == pl.num_programs(2) - 1)
    def _finalize():
        b = bm_ref[...] + eb_ref[...] * jnp.exp(0.5 * blv_ref[...])
        out_ref[...] = (acc_ref[...] + b).astype(out_ref.dtype)


# --------------------------------------------------------------------------
# Wrapper
# --------------------------------------------------------------------------

def _round_up(v, m):
    return ((v + m - 1) // m) * m


def _pad2d(a, rows, cols):
    r, c = a.shape
    if r == rows and c == cols:
        return a                      # aligned sizes: no hidden pad pass
    return jnp.pad(a, ((0, rows - r), (0, cols - c)))


def _pick_block(dim, target, base=128):
    """dim if dim <= target, else the largest multiple of `base` that divides
    `dim` and is <= target.  `dim` is always a multiple of `base` here."""
    if dim <= target:
        return dim
    best = base
    m = base
    while m <= target:
        if dim % m == 0:
            best = m
        m += base
    return best


def _compiler_params(dim_sem, tile_bytes):
    # Explicit VMEM budget: double-buffered tiles + headroom, clamped so it
    # stays comfortably inside v7x's 64 MiB physical VMEM.
    need = 2 * int(tile_bytes) + (8 << 20)
    limit = int(min(max(need, 32 << 20), 48 << 20))
    return pltpu.CompilerParams(dimension_semantics=dim_sem,
                                vmem_limit_bytes=limit)


def variational_linear_forward(x, weight_mean, weight_logvar, bias_mean,
                               bias_logvar, eps_w, eps_b, *,
                               tm=256, tn=512, tk=512, mxu_dtype=None):
    """Pallas forward pass of VariationalLinear.

    x:             (B, input_size)
    weight_mean:   (output_size, input_size)
    weight_logvar: (output_size, input_size)
    bias_mean:     (output_size,)
    bias_logvar:   (output_size,)
    eps_w:         (output_size, input_size)   standard-normal draw
    eps_b:         (output_size,)              standard-normal draw
    mxu_dtype:     dtype fed to the MXU.  jnp.bfloat16 is recommended on
                   v5e/v6e/v7x for ~2x MXU throughput (f32 accumulation is
                   kept; expect ~1e-2 relative deviation vs f32).
    returns:       (B, output_size)

    For v7x, prefer tile choices where Np//tn >= 2 (or Mp//tm >= 2) so both
    TensorCores receive 'parallel' grid work.
    """
    B, in_size = x.shape
    out_size = weight_mean.shape[0]
    out_dtype = x.dtype
    if mxu_dtype is None:
        mxu_dtype = x.dtype
    mxu_dtype = jnp.dtype(mxu_dtype)
    is_bf16 = mxu_dtype == jnp.dtype(jnp.bfloat16)

    # Lane-dense padded problem sizes (last dims multiples of 128).
    Kp = _round_up(in_size, 128)
    Np = _round_up(out_size, 128)
    tk = _pick_block(Kp, tk)
    tn = _pick_block(Np, tn)

    # Bias params as (1, Np) lane-dense rows; padded entries reparameterize
    # to exactly 0.
    bm_p = _pad2d(bias_mean.reshape(1, out_size), 1, Np)
    blv_p = _pad2d(bias_logvar.reshape(1, out_size), 1, Np)
    eb_p = _pad2d(eps_b.reshape(1, out_size), 1, Np)

    wm_p = _pad2d(weight_mean, Np, Kp)
    wlv_p = _pad2d(weight_logvar, Np, Kp)
    ew_p = _pad2d(eps_w, Np, Kp)

    itemsize_x = mxu_dtype.itemsize
    itemsize_o = jnp.dtype(out_dtype).itemsize

    # --------------------- small-batch fused path ---------------------------
    if B <= tm:
        sub = 16 if is_bf16 else 8          # full sublane packing for bf16
        Mp = _round_up(B, sub)
        x_p = _pad2d(x, Mp, Kp).astype(mxu_dtype)

        tile_bytes = (Mp * tk * itemsize_x          # x tile
                      + 3 * tn * tk * 4             # weight param tiles (f32)
                      + 3 * tn * 4                  # bias param tiles
                      + Mp * tn * itemsize_o        # out tile
                      + Mp * tn * 4)                # f32 accumulator

        out_p = pl.pallas_call(
            _fused_reparam_matmul_kernel,
            out_shape=jax.ShapeDtypeStruct((Mp, Np), out_dtype),
            grid=(Np // tn, Kp // tk),
            in_specs=[
                pl.BlockSpec((Mp, tk), lambda j, k: (0, k)),   # x
                pl.BlockSpec((tn, tk), lambda j, k: (j, k)),   # weight_mean
                pl.BlockSpec((tn, tk), lambda j, k: (j, k)),   # weight_logvar
                pl.BlockSpec((tn, tk), lambda j, k: (j, k)),   # eps_w
                pl.BlockSpec((1, tn), lambda j, k: (0, j)),    # bias_mean
                pl.BlockSpec((1, tn), lambda j, k: (0, j)),    # bias_logvar
                pl.BlockSpec((1, tn), lambda j, k: (0, j)),    # eps_b
            ],
            out_specs=pl.BlockSpec((Mp, tn), lambda j, k: (0, j)),
            scratch_shapes=[pltpu.VMEM((Mp, tn), jnp.float32)],
            compiler_params=_compiler_params(("parallel", "arbitrary"),
                                             tile_bytes),
        )(x_p, wm_p, wlv_p, ew_p, bm_p, blv_p, eb_p)

        return out_p[:B, :out_size]

    # --------------------- large-batch two-pass path ------------------------
    Mp = _round_up(B, tm)
    x_p = _pad2d(x, Mp, Kp).astype(mxu_dtype)

    # Pass 1: reparameterize the weight ONCE with big HBM-roofline-friendly
    # blocks, writing it transposed into canonical (Kp, Np) layout.
    rn = _pick_block(Np, 512)
    rk = _pick_block(Kp, 512)
    reparam_bytes = 3 * rn * rk * 4 + rn * rk * itemsize_x
    w_kn = pl.pallas_call(
        _reparam_transpose_kernel,
        out_shape=jax.ShapeDtypeStruct((Kp, Np), mxu_dtype),
        grid=(Np // rn, Kp // rk),
        in_specs=[pl.BlockSpec((rn, rk), lambda n, k: (n, k))] * 3,
        out_specs=pl.BlockSpec((rk, rn), lambda n, k: (k, n)),
        compiler_params=_compiler_params(("parallel", "parallel"),
                                         reparam_bytes),
    )(wm_p, wlv_p, ew_p)

    # Pass 2: tiled MXU matmul + fused bias reparam/add on the K finalize.
    mm_bytes = (tm * tk * itemsize_x
                + tk * tn * itemsize_x
                + 3 * tn * 4
                + tm * tn * itemsize_o
                + tm * tn * 4)
    out_p = pl.pallas_call(
        _matmul_bias_kernel,
        out_shape=jax.ShapeDtypeStruct((Mp, Np), out_dtype),
        grid=(Mp // tm, Np // tn, Kp // tk),
        in_specs=[
            pl.BlockSpec((tm, tk), lambda i, j, k: (i, k)),    # x
            pl.BlockSpec((tk, tn), lambda i, j, k: (k, j)),    # weight (K, N)
            pl.BlockSpec((1, tn), lambda i, j, k: (0, j)),     # bias_mean
            pl.BlockSpec((1, tn), lambda i, j, k: (0, j)),     # bias_logvar
            pl.BlockSpec((1, tn), lambda i, j, k: (0, j)),     # eps_b
        ],
        out_specs=pl.BlockSpec((tm, tn), lambda i, j, k: (i, j)),
        scratch_shapes=[pltpu.VMEM((tm, tn), jnp.float32)],
        compiler_params=_compiler_params(
            ("parallel", "parallel", "arbitrary"), mm_bytes),
    )(x_p, w_kn, bm_p, blv_p, eb_p)

    return out_p[:B, :out_size]


if __name__ == "__main__":
    # Small shapes consistent with the Linear layer: batch=8, in=32, out=16.
    B, IN, OUT = 8, 32, 16

    key = jax.random.PRNGKey(0)
    k_wm, k_bm, k_x, k_ew, k_eb = jax.random.split(key, 5)

    # __init__ semantics: weight_mean ~ randn, weight_logvar = 0,
    #                     bias_mean   ~ randn, bias_logvar   = 0
    weight_mean = jax.random.normal(k_wm, (OUT, IN), jnp.float32)
    weight_logvar = jnp.zeros((OUT, IN), jnp.float32)
    bias_mean = jax.random.normal(k_bm, (OUT,), jnp.float32)
    bias_logvar = jnp.zeros((OUT,), jnp.float32)

    # Deterministic "randn_like" draws for the reparameterization trick.
    eps_w = jax.random.normal(k_ew, (OUT, IN), jnp.float32)
    eps_b = jax.random.normal(k_eb, (OUT,), jnp.float32)

    x = jax.random.normal(k_x, (B, IN), jnp.float32)

    out = variational_linear_forward(
        x, weight_mean, weight_logvar, bias_mean, bias_logvar, eps_w, eps_b)
    out = jax.block_until_ready(out)

    # Pure-JAX reference of the same forward semantics (f32 path; use a looser
    # tolerance if running with mxu_dtype=jnp.bfloat16).
    w_ref = weight_mean + eps_w * jnp.exp(0.5 * weight_logvar)
    b_ref = bias_mean + eps_b * jnp.exp(0.5 * bias_logvar)
    ref = x @ w_ref.T + b_ref[None, :]
    assert out.shape == (B, OUT)
    assert jnp.allclose(out, ref, atol=1e-5, rtol=1e-5), \
        float(jnp.max(jnp.abs(out - ref)))

    # TODO(synk): kl_divergence() is not part of forward(); not implemented as a kernel.
    print("KERNEL_OK")
</pallas_src>

<mosaic_0001>
module attributes {stable_mosaic.version = 11 : i64} {
  func.func @_fused_reparam_matmul_kernel(%arg0: i32, %arg1: i32, %arg2: memref<8x128xf32, #tpu.memory_space<vmem>>, %arg3: memref<128x128xf32, #tpu.memory_space<vmem>>, %arg4: memref<128x128xf32, #tpu.memory_space<vmem>>, %arg5: memref<128x128xf32, #tpu.memory_space<vmem>>, %arg6: memref<1x128xf32, #tpu.memory_space<vmem>>, %arg7: memref<1x128xf32, #tpu.memory_space<vmem>>, %arg8: memref<1x128xf32, #tpu.memory_space<vmem>>, %arg9: memref<8x128xf32, #tpu.memory_space<vmem>>, %arg10: memref<8x128xf32, #tpu.memory_space<vmem>>) attributes {dimension_semantics = [#tpu.dimension_semantics<parallel>, #tpu.dimension_semantics<arbitrary>], iteration_bounds = array<i64: 1, 1>, scalar_prefetch = 0 : i64, scratch_operands = 1 : i64, tpu.core_type = #tpu.core_type<tc>, window_params = [{transform_indices = @transform_0, window_bounds = array<i64: 8, 128>}, {transform_indices = @transform_1, window_bounds = array<i64: 128, 128>}, {transform_indices = @transform_2, window_bounds = array<i64: 128, 128>}, {transform_indices = @transform_3, window_bounds = array<i64: 128, 128>}, {transform_indices = @transform_4, window_bounds = array<i64: 1, 128>}, {transform_indices = @transform_5, window_bounds = array<i64: 1, 128>}, {transform_indices = @transform_6, window_bounds = array<i64: 1, 128>}, {transform_indices = @transform_7, window_bounds = array<i64: 8, 128>}]} {
    %c0_i32 = arith.constant 0 : i32
    %0 = arith.cmpi eq, %arg1, %c0_i32 : i32
    %1 = arith.extui %0 : i1 to i32
    %c0_i32_0 = arith.constant 0 : i32
    %2 = arith.cmpi ne, %1, %c0_i32_0 : i32
    scf.if %2 {
      %cst_15 = arith.constant 0.000000e+00 : f32
      %19 = vector.broadcast %cst_15 : f32 to vector<8x128xf32>
      %c0_16 = arith.constant 0 : index
      %c0_17 = arith.constant 0 : index
      %20 = vector.load %arg10[%c0_16, %c0_17] : memref<8x128xf32, #tpu.memory_space<vmem>>, vector<8x128xf32>
      tpu.vector_store %arg10[%c0_16, %c0_17], %19 {strides = array<i32>} : memref<8x128xf32, #tpu.memory_space<vmem>>, vector<8x128xf32>,
    } else {
    }
    %c0 = arith.constant 0 : index
    %c0_1 = arith.constant 0 : index
    %3 = vector.load %arg3[%c0, %c0_1] : memref<128x128xf32, #tpu.memory_space<vmem>>, vector<128x128xf32>
    %c0_2 = arith.constant 0 : index
    %c0_3 = arith.constant 0 : index
    %4 = vector.load %arg5[%c0_2, %c0_3] : memref<128x128xf32, #tpu.memory_space<vmem>>, vector<128x128xf32>
    %c0_4 = arith.constant 0 : index
    %c0_5 = arith.constant 0 : index
    %5 = vector.load %arg4[%c0_4, %c0_5] : memref<128x128xf32, #tpu.memory_space<vmem>>, vector<128x128xf32>
    %cst = arith.constant 5.000000e-01 : f32
    %6 = vector.broadcast %cst : f32 to vector<128x128xf32>
    %7 = arith.mulf %6, %5 : vector<128x128xf32>
    %8 = math.exp %7 : vector<128x128xf32>
    %9 = arith.mulf %4, %8 : vector<128x128xf32>
    %10 = arith.addf %3, %9 : vector<128x128xf32>
    %c0_6 = arith.constant 0 : index
    %c0_7 = arith.constant 0 : index
    %11 = vector.load %arg10[%c0_6, %c0_7] : memref<8x128xf32, #tpu.memory_space<vmem>>, vector<8x128xf32>
    %c0_8 = arith.constant 0 : index
    %c0_9 = arith.constant 0 : index
    %12 = vector.load %arg2[%c0_8, %c0_9] : memref<8x128xf32, #tpu.memory_space<vmem>>, vector<8x128xf32>
    %cst_10 = arith.constant dense<0.000000e+00> : vector<8x128xf32>
    %13 = tpu.matmul %12, %10, %cst_10 {dimension_numbers = #tpu.dot_dimension_numbers<[1], [1], [0], [0], [0, 0, 1, 0], [], []>} : vector<8x128xf32>, vector<128x128xf32>, vector<8x128xf32> -> vector<8x128xf32>
    %14 = arith.addf %11, %13 : vector<8x128xf32>
    %c0_11 = arith.constant 0 : index
    %c0_12 = arith.constant 0 : index
    %15 = vector.load %arg10[%c0_11, %c0_12] : memref<8x128xf32, #tpu.memory_space<vmem>>, vector<8x128xf32>
    tpu.vector_store %arg10[%c0_11, %c0_12], %14 {strides = array<i32>} : memref<8x128xf32, #tpu.memory_space<vmem>>, vector<8x128xf32>,
    %c0_i32_13 = arith.constant 0 : i32
    %16 = arith.cmpi eq, %arg1, %c0_i32_13 : i32
    %17 = arith.extui %16 : i1 to i32
    %c0_i32_14 = arith.constant 0 : i32
    %18 = arith.cmpi ne, %17, %c0_i32_14 : i32
    scf.if %18 {
      %c0_15 = arith.constant 0 : index
      %c0_16 = arith.constant 0 : index
      %19 = vector.load %arg6[%c0_15, %c0_16] : memref<1x128xf32, #tpu.memory_space<vmem>>, vector<1x128xf32>
      %c0_17 = arith.constant 0 : index
      %c0_18 = arith.constant 0 : index
      %20 = vector.load %arg8[%c0_17, %c0_18] : memref<1x128xf32, #tpu.memory_space<vmem>>, vector<1x128xf32>
      %c0_19 = arith.constant 0 : index
      %c0_20 = arith.constant 0 : index
      %21 = vector.load %arg7[%c0_19, %c0_20] : memref<1x128xf32, #tpu.memory_space<vmem>>, vector<1x128xf32>
      %cst_21 = arith.constant 5.000000e-01 : f32
      %22 = vector.broadcast %cst_21 : f32 to vector<1x128xf32>
      %23 = arith.mulf %22, %21 : vector<1x128xf32>
      %24 = math.exp %23 : vector<1x128xf32>
      %25 = arith.mulf %20, %24 : vector<1x128xf32>
      %26 = arith.addf %19, %25 : vector<1x128xf32>
      %c0_22 = arith.constant 0 : index
      %c0_23 = arith.constant 0 : index
      %27 = vector.load %arg10[%c0_22, %c0_23] : memref<8x128xf32, #tpu.memory_space<vmem>>, vector<8x128xf32>
      %28 = vector.broadcast %26 : vector<1x128xf32> to vector<8x128xf32>
      %29 = arith.addf %27, %28 : vector<8x128xf32>
      %c0_24 = arith.constant 0 : index
      %c0_25 = arith.constant 0 : index
      %30 = vector.load %arg9[%c0_24, %c0_25] : memref<8x128xf32, #tpu.memory_space<vmem>>, vector<8x128xf32>
      tpu.vector_store %arg9[%c0_24, %c0_25], %29 {strides = array<i32>} : memref<8x128xf32, #tpu.memory_space<vmem>>, vector<8x128xf32>,
    } else {
    }
    return
  }
  func.func @transform_0(%arg0: i32, %arg1: i32) -> (i32, i32) {
    %c0_i32 = arith.constant 0 : i32
    %c0_i32_0 = arith.constant 0 : i32
    return %c0_i32, %arg1 : i32, i32
  }
  func.func @transform_1(%arg0: i32, %arg1: i32) -> (i32, i32) {
    %c0_i32 = arith.constant 0 : i32
    return %arg0, %arg1 : i32, i32
  }
  func.func @transform_2(%arg0: i32, %arg1: i32) -> (i32, i32) {
    %c0_i32 = arith.constant 0 : i32
    return %arg0, %arg1 : i32, i32
  }
  func.func @transform_3(%arg0: i32, %arg1: i32) -> (i32, i32) {
    %c0_i32 = arith.constant 0 : i32
    return %arg0, %arg1 : i32, i32
  }
  func.func @transform_4(%arg0: i32, %arg1: i32) -> (i32, i32) {
    %c0_i32 = arith.constant 0 : i32
    %c0_i32_0 = arith.constant 0 : i32
    return %c0_i32, %arg0 : i32, i32
  }
  func.func @transform_5(%arg0: i32, %arg1: i32) -> (i32, i32) {
    %c0_i32 = arith.constant 0 : i32
    %c0_i32_0 = arith.constant 0 : i32
    return %c0_i32, %arg0 : i32, i32
  }
  func.func @transform_6(%arg0: i32, %arg1: i32) -> (i32, i32) {
    %c0_i32 = arith.constant 0 : i32
    %c0_i32_0 = arith.constant 0 : i32
    return %c0_i32, %arg0 : i32, i32
  }
  func.func @transform_7(%arg0: i32, %arg1: i32) -> (i32, i32) {
    %c0_i32 = arith.constant 0 : i32
    %c0_i32_0 = arith.constant 0 : i32
    return %c0_i32, %arg0 : i32, i32
  }
}

</mosaic_0001>

<llo_original>
// kernel: tpu_custom_call.1
$region0: #{tpu_custom_call.1}
  #allocation0 [shape = 'u32[]', space=smem, size = 0x4, offset = 0x4, fixed_abs, tag = 'smem constant byte address 0x4 - core index']
  #allocation1 [shape = 'u32[144,128]{1,0:T(1,128)}', space=vmem, size = 0x12000, scoped, tag = 'internal scratch']
  #allocation2 [shape = 'f32[8,128]{1,0:T(8,128)}', space=vmem, size = 0x1000, scoped, tag = 'scratch operand']
  %s0 = inlined_call_operand.hbm [shape: f32[8,128], index: 0, kind: input, shape index: {}]
  %s1 = inlined_call_operand.hbm [shape: f32[128,128], index: 1, kind: input, shape index: {}]
  %s2 = inlined_call_operand.hbm [shape: f32[128,128], index: 2, kind: input, shape index: {}]
  %s3 = inlined_call_operand.hbm [shape: f32[128,128], index: 3, kind: input, shape index: {}]
  %s4 = inlined_call_operand.vmem [shape: f32[1,128], index: 4, kind: input, shape index: {}]
  %s5 = inlined_call_operand.vmem [shape: f32[1,128], index: 5, kind: input, shape index: {}]
  %s6 = inlined_call_operand.vmem [shape: f32[1,128], index: 6, kind: input, shape index: {}]
  %s7 = inlined_call_operand.hbm [shape: f32[8,128], index: 7, kind: output, shape index: {}]
  %s8 = sld [smem:[#allocation0]]
  $region62: #{tpu_custom_call.1} parent=0
    _
  %s10 = ssub.s32 1, %s8
  %s11 = scalar_select 0, %s10, %s8
  $region1: #{tpu_custom_call.1} parent=0
    #allocation3 [shape = 'u8[4096]{0}', space=vmem, size = 0x1000, scoped, tag = 'input window, operand 0, single buffered']
    #allocation4 [shape = 's32[1]{0}', space=sflag, size = 0x4, scoped, tag = 'scoped memory for tpu_custom_call.1']
    #allocation5 [shape = 's32[1]{0}', space=sflag, size = 0x4, scoped, tag = 'scoped memory for tpu_custom_call.1']
    #allocation6 [shape = 'u8[65536]{0}', space=vmem, size = 0x10000, scoped, tag = 'input window, operand 1, single buffered']
    #allocation7 [shape = 's32[1]{0}', space=sflag, size = 0x4, scoped, tag = 'scoped memory for tpu_custom_call.1']
    #allocation8 [shape = 'u8[65536]{0}', space=vmem, size = 0x10000, scoped, tag = 'input window, operand 2, single buffered']
    #allocation9 [shape = 'u8[65536]{0}', space=vmem, size = 0x10000, scoped, tag = 'input window, operand 3, single buffered']
    #allocation10 [shape = 's32[1]{0}', space=sflag, size = 0x4, scoped, tag = 'scoped memory for tpu_custom_call.1']
    #allocation11 [shape = 'u8[4096]{0}', space=vmem, size = 0x1000, scoped, tag = 'output window, operand 0, single buffered']
    %12 = vsyncpa [#allocation4], 0
    %13 = vsyncpa [#allocation7], 0
    %14 = vsyncpa [#allocation10], 0
    %15 = vsyncpa [#allocation5], 0
    // Predicated region
    $region2: #{tpu_custom_call.1} parent=1 // pred_check
      _
    $region3: #{tpu_custom_call.1} parent=1 // pred_check_branch
      %17 = sbr.rel (0) target = $region5
    $region4: #{tpu_custom_call.1} parent=1 // pred_region
      %s19 = ssub.s32 128, 128
      %20 = vsyncadd [#allocation4], %s19
      %s22 = sshll.u32 [#allocation3], 4
      %s23 = int_to_ptr.vmem [resolvable:$true] %s22
      %25 = dma.hbm_to_vmem [thread:$0]  %s0, 128, %s23, [#allocation4]
    $region5: #{tpu_custom_call.1} parent=1 // pred_fallthru
      _
    // Predicated region
    $region6: #{tpu_custom_call.1} parent=1 // pred_check
      _
    $region7: #{tpu_custom_call.1} parent=1 // pred_check_branch
      %27 = sbr.rel (0) target = $region9
    $region8: #{tpu_custom_call.1} parent=1 // pred_region
      %s29 = ssub.s32 2048, 2048
      %30 = vsyncadd [#allocation7], %s29
      %s31 = sshll.u32 [#allocation6], 4
      %s32 = int_to_ptr.vmem [resolvable:$true] %s31
      %37 = dma.hbm_to_vmem [thread:$0]  %s1, 2048, %s32, [#allocation7], 128, 128, 8
    $region9: #{tpu_custom_call.1} parent=1 // pred_fallthru
      _
    // Predicated region
    $region10: #{tpu_custom_call.1} parent=1 // pred_check
      _
    $region11: #{tpu_custom_call.1} parent=1 // pred_check_branch
      %39 = sbr.rel (0) target = $region13
    $region12: #{tpu_custom_call.1} parent=1 // pred_region
      %s41 = ssub.s32 2048, 2048
      %42 = vsyncadd [#allocation7], %s41
      %s43 = sshll.u32 [#allocation8], 4
      %s44 = int_to_ptr.vmem [resolvable:$true] %s43
      %49 = dma.hbm_to_vmem [thread:$0]  %s2, 2048, %s44, [#allocation7], 128, 128, 8
    $region13: #{tpu_custom_call.1} parent=1 // pred_fallthru
      _
    // Predicated region
    $region14: #{tpu_custom_call.1} parent=1 // pred_check
      _
    $region15: #{tpu_custom_call.1} parent=1 // pred_check_branch
      %51 = sbr.rel (0) target = $region17
    $region16: #{tpu_custom_call.1} parent=1 // pred_region
      %s53 = ssub.s32 2048, 2048
      %54 = vsyncadd [#allocation10], %s53
      %s55 = sshll.u32 [#allocation9], 4
      %s56 = int_to_ptr.vmem [resolvable:$true] %s55
      %61 = dma.hbm_to_vmem [thread:$0]  %s3, 2048, %s56, [#allocation10], 128, 128, 8
    $region17: #{tpu_custom_call.1} parent=1 // pred_fallthru
      _
    // Predicated region
    $region18: #{tpu_custom_call.1} parent=1 // pred_check
      _
    $region19: #{tpu_custom_call.1} parent=1 // pred_check_branch
      %63 = sbr.rel (0) target = $region21
    $region20: #{tpu_custom_call.1} parent=1 // pred_region
      _
    $region21: #{tpu_custom_call.1} parent=1 // pred_fallthru
      _
    // Predicated region
    $region22: #{tpu_custom_call.1} parent=1 // pred_check
      _
    $region23: #{tpu_custom_call.1} parent=1 // pred_check_branch
      %65 = sbr.rel (0) target = $region25
    $region24: #{tpu_custom_call.1} parent=1 // pred_region
      _
    $region25: #{tpu_custom_call.1} parent=1 // pred_fallthru
      _
    // Predicated region
    $region26: #{tpu_custom_call.1} parent=1 // pred_check
      _
    $region27: #{tpu_custom_call.1} parent=1 // pred_check_branch
      %67 = sbr.rel (0) target = $region29
    $region28: #{tpu_custom_call.1} parent=1 // pred_region
      _
    $region29: #{tpu_custom_call.1} parent=1 // pred_fallthru
      _
    // Predicated region
    $region30: #{tpu_custom_call.1} parent=1 // pred_check
      _
    $region31: #{tpu_custom_call.1} parent=1 // pred_check_branch
      %69 = sbr.rel (0) target = $region33
    $region32: #{tpu_custom_call.1} parent=1 // pred_region
      %70 = dma.done [#allocation4], 128
    $region33: #{tpu_custom_call.1} parent=1 // pred_fallthru
      _
    // Predicated region
    $region34: #{tpu_custom_call.1} parent=1 // pred_check
      _
    $region35: #{tpu_custom_call.1} parent=1 // pred_check_branch
      %72 = sbr.rel (0) target = $region37
    $region36: #{tpu_custom_call.1} parent=1 // pred_region
      %73 = dma.done [#allocation7], 2048
    $region37: #{tpu_custom_call.1} parent=1 // pred_fallthru
      _
    // Predicated region
    $region38: #{tpu_custom_call.1} parent=1 // pred_check
      _
    $region39: #{tpu_custom_call.1} parent=1 // pred_check_branch
      %75 = sbr.rel (0) target = $region41
    $region40: #{tpu_custom_call.1} parent=1 // pred_region
      %76 = dma.done [#allocation7], 2048
    $region41: #{tpu_custom_call.1} parent=1 // pred_fallthru
      _
    // Predicated region
    $region42: #{tpu_custom_call.1} parent=1 // pred_check
      _
    $region43: #{tpu_custom_call.1} parent=1 // pred_check_branch
      %78 = sbr.rel (0) target = $region45
    $region44: #{tpu_custom_call.1} parent=1 // pred_region
      %79 = dma.done [#allocation10], 2048
    $region45: #{tpu_custom_call.1} parent=1 // pred_fallthru
      _
    %p80 = scmp.eq.s32.totalorder 0, 0
    // Predicated region
    $region46: #{tpu_custom_call.1} parent=1 // pred_check
      %p81 = pneg %p80
    $region47: #{tpu_custom_call.1} parent=1 // pred_check_branch
      %83 = sbr.rel (%p81) target = $region49
    $region48: #{tpu_custom_call.1} parent=1 // pred_region
      %84 = vst [vmem:[#allocation2] sm:$0xff] 0.0
    $region49: #{tpu_custom_call.1} parent=1 // pred_fallthru
      _
    %v85 = vld [vmem:[#allocation6] sm:$0xff]
    %v86 = vld [vmem:[#allocation6 + $0x8] sm:$0xff]
    %v87 = vld [vmem:[#allocation6 + $0x10] sm:$0xff]
    %v88 = vld [vmem:[#allocation6 + $0x18] sm:$0xff]
    %v89 = vld [vmem:[#allocation6 + $0x20] sm:$0xff]
    %v90 = vld [vmem:[#allocation6 + $0x28] sm:$0xff]
    %v91 = vld [vmem:[#allocation6 + $0x30] sm:$0xff]
    %v92 = vld [vmem:[#allocation6 + $0x38] sm:$0xff]
    %v93 = vld [vmem:[#allocation6 + $0x40] sm:$0xff]
    %v94 = vld [vmem:[#allocation6 + $0x48] sm:$0xff]
    %v95 = vld [vmem:[#allocation6 + $0x50] sm:$0xff]
    %v96 = vld [vmem:[#allocation6 + $0x58] sm:$0xff]
    %v97 = vld [vmem:[#allocation6 + $0x60] sm:$0xff]
    %v98 = vld [vmem:[#allocation6 + $0x68] sm:$0xff]
    %v99 = vld [vmem:[#allocation6 + $0x70] sm:$0xff]
    %v100 = vld [vmem:[#allocation6 + $0x78] sm:$0xff]
    %v101 = vld [vmem:[#allocation9] sm:$0xff]
    %v102 = vld [vmem:[#allocation9 + $0x8] sm:$0xff]
    %v103 = vld [vmem:[#allocation9 + $0x10] sm:$0xff]
    %v104 = vld [vmem:[#allocation9 + $0x18] sm:$0xff]
    %v105 = vld [vmem:[#allocation9 + $0x20] sm:$0xff]
    %v106 = vld [vmem:[#allocation9 + $0x28] sm:$0xff]
    %v107 = vld [vmem:[#allocation9 + $0x30] sm:$0xff]
    %v108 = vld [vmem:[#allocation9 + $0x38] sm:$0xff]
    %v109 = vld [vmem:[#allocation9 + $0x40] sm:$0xff]
    %v110 = vld [vmem:[#allocation9 + $0x48] sm:$0xff]
    %v111 = vld [vmem:[#allocation9 + $0x50] sm:$0xff]
    %v112 = vld [vmem:[#allocation9 + $0x58] sm:$0xff]
    %v113 = vld [vmem:[#allocation9 + $0x60] sm:$0xff]
    %v114 = vld [vmem:[#allocation9 + $0x68] sm:$0xff]
    %v115 = vld [vmem:[#allocation9 + $0x70] sm:$0xff]
    %v116 = vld [vmem:[#allocation9 + $0x78] sm:$0xff]
    %v117 = vld [vmem:[#allocation8] sm:$0xff]
    %v118 = vld [vmem:[#allocation8 + $0x8] sm:$0xff]
    %v119 = vld [vmem:[#allocation8 + $0x10] sm:$0xff]
    %v120 = vld [vmem:[#allocation8 + $0x18] sm:$0xff]
    %v121 = vld [vmem:[#allocation8 + $0x20] sm:$0xff]
    %v122 = vld [vmem:[#allocation8 + $0x28] sm:$0xff]
    %v123 = vld [vmem:[#allocation8 + $0x30] sm:$0xff]
    %v124 = vld [vmem:[#allocation8 + $0x38] sm:$0xff]
    %v125 = vld [vmem:[#allocation8 + $0x40] sm:$0xff]
    %v126 = vld [vmem:[#allocation8 + $0x48] sm:$0xff]
    %v127 = vld [vmem:[#allocation8 + $0x50] sm:$0xff]
    %v128 = vld [vmem:[#allocation8 + $0x58] sm:$0xff]
    %v129 = vld [vmem:[#allocation8 + $0x60] sm:$0xff]
    %v130 = vld [vmem:[#allocation8 + $0x68] sm:$0xff]
    %v131 = vld [vmem:[#allocation8 + $0x70] sm:$0xff]
    %v132 = vld [vmem:[#allocation8 + $0x78] sm:$0xff]
    %v133 = vmul.f32 %v117, 0.5
    %v134 = vmul.f32 %v118, 0.5
    %v135 = vmul.f32 %v119, 0.5
    %v136 = vmul.f32 %v120, 0.5
    %v137 = vmul.f32 %v121, 0.5
    %v138 = vmul.f32 %v122, 0.5
    %v139 = vmul.f32 %v123, 0.5
    %v140 = vmul.f32 %v124, 0.5
    %v141 = vmul.f32 %v125, 0.5
    %v142 = vmul.f32 %v126, 0.5
    %v143 = vmul.f32 %v127, 0.5
    %v144 = vmul.f32 %v128, 0.5
    %v145 = vmul.f32 %v129, 0.5
    %v146 = vmul.f32 %v130, 0.5
    %v147 = vmul.f32 %v131, 0.5
    %v148 = vmul.f32 %v132, 0.5
    %v149 = vmul.f32 %v133, 1.442695
    %v150 = vpow.pop %v149
    %v151 = vmul.f32 %v134, 1.442695
    %v152 = vpow.pop %v151
    %v153 = vmul.f32 %v135, 1.442695
    %v154 = vpow.pop %v153
    %v155 = vmul.f32 %v136, 1.442695
    %v156 = vpow.pop %v155
    %v157 = vmul.f32 %v137, 1.442695
    %v158 = vpow.pop %v157
    %v159 = vmul.f32 %v138, 1.442695
    %v160 = vpow.pop %v159
    %v161 = vmul.f32 %v139, 1.442695
    %v162 = vpow.pop %v161
    %v163 = vmul.f32 %v140, 1.442695
    %v164 = vpow.pop %v163
    %v165 = vmul.f32 %v141, 1.442695
    %v166 = vpow.pop %v165
    %v167 = vmul.f32 %v142, 1.442695
    %v168 = vpow.pop %v167
    %v169 = vmul.f32 %v143, 1.442695
    %v170 = vpow.pop %v169
    %v171 = vmul.f32 %v144, 1.442695
    %v172 = vpow.pop %v171
    %v173 = vmul.f32 %v145, 1.442695
    %v174 = vpow.pop %v173
    %v175 = vmul.f32 %v146, 1.442695
    %v176 = vpow.pop %v175
    %v177 = vmul.f32 %v147, 1.442695
    %v178 = vpow.pop %v177
    %v179 = vmul.f32 %v148, 1.442695
    %v180 = vpow.pop %v179
    %v181 = vmul.f32 %v101, %v150
    %v182 = vmul.f32 %v102, %v152
    %v183 = vmul.f32 %v103, %v154
    %v184 = vmul.f32 %v104, %v156
    %v185 = vmul.f32 %v105, %v158
    %v186 = vmul.f32 %v106, %v160
    %v187 = vmul.f32 %v107, %v162
    %v188 = vmul.f32 %v108, %v164
    %v189 = vmul.f32 %v109, %v166
    %v190 = vmul.f32 %v110, %v168
    %v191 = vmul.f32 %v111, %v170
    %v192 = vmul.f32 %v112, %v172
    %v193 = vmul.f32 %v113, %v174
    %v194 = vmul.f32 %v114, %v176
    %v195 = vmul.f32 %v115, %v178
    %v196 = vmul.f32 %v116, %v180
    %v197 = vadd.f32 %v85, %v181
    %v198 = vadd.f32 %v86, %v182
    %v199 = vadd.f32 %v87, %v183
    %v200 = vadd.f32 %v88, %v184
    %v201 = vadd.f32 %v89, %v185
    %v202 = vadd.f32 %v90, %v186
    %v203 = vadd.f32 %v91, %v187
    %v204 = vadd.f32 %v92, %v188
    %v205 = vadd.f32 %v93, %v189
    %v206 = vadd.f32 %v94, %v190
    %v207 = vadd.f32 %v95, %v191
    %v208 = vadd.f32 %v96, %v192
    %v209 = vadd.f32 %v97, %v193
    %v210 = vadd.f32 %v98, %v194
    %v211 = vadd.f32 %v99, %v195
    %v212 = vadd.f32 %v100, %v196
    %v213 = vld [vmem:[#allocation2] sm:$0xff]
    %v214 = vld [vmem:[#allocation3] sm:$0xff]
    %215 = vmatprep.subr.mxu0 0.0
    %216 = vmatpush1.xpose.msra.mxu0 %v212
    %217 = vmatprep.subr.mxu0 0.0
    %218 = vmatpush1.xpose.msra.mxu0 %v211
    %219 = vmatprep.subr.mxu0 0.0
    %220 = vmatpush1.xpose.msra.mxu0 %v210
    %221 = vmatprep.subr.mxu0 0.0
    %222 = vmatpush1.xpose.msra.mxu0 %v209
    %223 = vmatprep.subr.mxu0 0.0
    %224 = vmatpush1.xpose.msra.mxu0 %v208
    %225 = vmatprep.subr.mxu0 0.0
    %226 = vmatpush1.xpose.msra.mxu0 %v207
    %227 = vmatprep.subr.mxu0 0.0
    %228 = vmatpush1.xpose.msra.mxu0 %v206
    %229 = vmatprep.subr.mxu0 0.0
    %230 = vmatpush1.xpose.msra.mxu0 %v205
    %231 = vmatprep.subr.mxu0 0.0
    %232 = vmatpush1.xpose.msra.mxu0 %v204
    %233 = vmatprep.subr.mxu0 0.0
    %234 = vmatpush1.xpose.msra.mxu0 %v203
    %235 = vmatprep.subr.mxu0 0.0
    %236 = vmatpush1.xpose.msra.mxu0 %v202
    %237 = vmatprep.subr.mxu0 0.0
    %238 = vmatpush1.xpose.msra.mxu0 %v201
    %239 = vmatprep.subr.mxu0 0.0
    %240 = vmatpush1.xpose.msra.mxu0 %v200
    %241 = vmatprep.subr.mxu0 0.0
    %242 = vmatpush1.xpose.msra.mxu0 %v199
    %243 = vmatprep.subr.mxu0 0.0
    %244 = vmatpush1.xpose.msra.mxu0 %v198
    %245 = vmatprep.subr.mxu0 0.0
    %246 = vmatpush1.xpose.msra.mxu0 %v197
    %247 = vmatprep.subr.mxu0 0.0
    %248 = vmatpush2.xpose.msra.mxu0 0.0
    %249 = vmatprep.subr.mxu0 0.0
    %250 = vmatpush2.xpose.msra.mxu0 0.0
    %251 = vmatprep.subr.mxu0 0.0
    %252 = vmatpush2.xpose.msra.mxu0 0.0
    %253 = vmatprep.subr.mxu0 0.0
    %254 = vmatpush2.xpose.msra.mxu0 0.0
    %255 = vmatprep.subr.mxu0 0.0
    %256 = vmatpush2.xpose.msra.mxu0 0.0
    %257 = vmatprep.subr.mxu0 0.0
    %258 = vmatpush2.xpose.msra.mxu0 0.0
    %259 = vmatprep.subr.mxu0 0.0
    %260 = vmatpush2.xpose.msra.mxu0 0.0
    %261 = vmatprep.subr.mxu0 0.0
    %262 = vmatpush2.xpose.msra.mxu0 0.0
    %263 = vmatprep.subr.mxu0 0.0
    %264 = vmatpush2.xpose.msra.mxu0 0.0
    %265 = vmatprep.subr.mxu0 0.0
    %266 = vmatpush2.xpose.msra.mxu0 0.0
    %267 = vmatprep.subr.mxu0 0.0
    %268 = vmatpush2.xpose.msra.mxu0 0.0
    %269 = vmatprep.subr.mxu0 0.0
    %270 = vmatpush2.xpose.msra.mxu0 0.0
    %271 = vmatprep.subr.mxu0 0.0
    %272 = vmatpush2.xpose.msra.mxu0 0.0
    %273 = vmatprep.subr.mxu0 0.0
    %274 = vmatpush2.xpose.msra.mxu0 0.0
    %275 = vmatprep.subr.mxu0 0.0
    %276 = vmatpush2.xpose.msra.mxu0 0.0
    %277 = vmatprep.subr.mxu0 0.0
    %278 = vmatpush2.xpose.msra.mxu0 0.0
    %279 = vmatprep.mubr.f32.mxu0 0.0
    %280 = vmatmul.mubr.f32.gmra.mxu0 %v214
    %v281 = vpop.f32.mrf.mxu0
    %v282 = vadd.f32 0.0, %v281
    %v283 = vpop.f32.mrf.mxu0
    %284 = vdwg.mxu0
    %v285 = vadd.f32 %v213, %v282
    %286 = vst [vmem:[#allocation2] sm:$0xff] %v285
    // Predicated region
    $region50: #{tpu_custom_call.1} parent=1 // pred_check
      %p287 = pneg %p80
    $region51: #{tpu_custom_call.1} parent=1 // pred_check_branch
      %289 = sbr.rel (%p287) target = $region53
    $region52: #{tpu_custom_call.1} parent=1 // pred_region
      %v290 = vld [vmem:[%s4] sm:$0x1]
      %v291 = vld [vmem:[%s6] sm:$0x1]
      %v292 = vld [vmem:[%s5] sm:$0x1]
      %v293 = vmul.f32 %v292, 0.5
      %v294 = vmul.f32 %v293, 1.442695
      %v295 = vpow.pop %v294
      %v296 = vmul.f32 %v291, %v295
      %v297 = vadd.f32 %v290, %v296
      %v298 = vld [vmem:[#allocation2] sm:$0xff]
      %v300 = vlaneseq
      %v301 = vshrl.u32 %v300, 7
      %v302 = vsub.s32 0, %v301
      %v303 = vrot.slane %v297, %v302
      %v305 = vadd.f32 %v298, %v303
      %306 = vst [vmem:[#allocation11] sm:$0xff] %v305
    $region53: #{tpu_custom_call.1} parent=1 // pred_fallthru
      _
    // Predicated region
    $region54: #{tpu_custom_call.1} parent=1 // pred_check
      _
    $region55: #{tpu_custom_call.1} parent=1 // pred_check_branch
      %308 = sbr.rel (0) target = $region57
    $region56: #{tpu_custom_call.1} parent=1 // pred_region
      %s310 = ssub.s32 128, 128
      %311 = vsyncadd [#allocation5], %s310
      %s313 = sshll.u32 [#allocation11], 4
      %s314 = int_to_ptr.vmem [resolvable:$true] %s313
      %316 = dma.vmem_to_hbm [thread:$0]  %s314, 128, %s7, [#allocation5]
    $region57: #{tpu_custom_call.1} parent=1 // pred_fallthru
      _
    // Predicated region
    $region58: #{tpu_custom_call.1} parent=1 // pred_check
      _
    $region59: #{tpu_custom_call.1} parent=1 // pred_check_branch
      %318 = sbr.rel (0) target = $region61
    $region60: #{tpu_custom_call.1} parent=1 // pred_region
      %319 = dma.done [#allocation5], 128
    $region61: #{tpu_custom_call.1} parent=1 // pred_fallthru
      _
    %320 = vsyncpa [#allocation4], 1
    %321 = vsyncpa [#allocation7], 1
    %322 = vsyncpa [#allocation10], 1
    %323 = vsyncpa [#allocation5], 1

</llo_original>
